<compile_context>
chip_gen: v7x
topology: tpu7x:2x2x1
jax: 0.10.0
libtpu: 0.0.40
codegen_flags: <defaults>
</compile_context>

<pallas_src>
import jax
import jax.numpy as jnp
from jax.experimental import pallas as pl
from jax.experimental.pallas import tpu as pltpu


def pad_prompter_kernel(x_ref, prompt_ref, o_ref):
    # x block: (Bt, lane_tile); prompt block: (1, lane_tile) -> broadcasts over rows.
    o_ref[...] = x_ref[...] + prompt_ref[...]


def _choose_tiles(B, N, itemsize, target_bytes=2 * 1024 * 1024):
    """Pick (batch_tile, lane_tile) satisfying the (8, 128) block constraint."""
    # Batch tile: must be a multiple of 8 dividing B, or equal to B.
    bt = 8 if (B % 8 == 0) else B
    # Lane tile: largest divisor of N that is a multiple of 128 and fits the
    # per-block byte budget; otherwise fall back to the full dim (always legal).
    lane = N
    if N % 128 == 0:
        cap = max(128, target_bytes // (bt * itemsize))
        best = None
        d = 128
        while d <= N:
            if N % d == 0 and d <= cap:
                best = d
            d += 128
        if best is not None:
            lane = best
    # Grow the batch tile if budget allows (fewer grid steps -> less per-step overhead).
    if B % 8 == 0:
        while (bt * 2 <= B and B % (bt * 2) == 0
               and (bt * 2) * lane * itemsize <= target_bytes):
            bt *= 2
    return bt, lane


def pad_prompter_forward(x, pad_up, pad_down, pad_left, pad_right,
                         prompt_size, image_size):
    B, C, H, W = x.shape
    assert C == 3 and H == image_size and W == image_size
    ps = prompt_size
    base_size = image_size - 2 * ps

    # --- Parameter glue (wrapper, fused by XLA): build ONE full prompt frame,
    # exactly mirroring the PyTorch concatenation.
    base = jnp.zeros((1, C, base_size, base_size), x.dtype)
    mid = jnp.concatenate([pad_left, base, pad_right], axis=3)
    prompt = jnp.concatenate([pad_up, mid, pad_down], axis=2)   # (1, C, H, W)

    # --- Lane-dense flattening: last dim becomes C*H*W (multiple of 128 for
    # typical image sizes; if not, the full-dim block is used, which is legal).
    N = C * H * W
    x_flat = x.reshape(B, N)
    prompt_flat = prompt.reshape(1, N)

    bt, lane = _choose_tiles(B, N, x.dtype.itemsize)
    grid = (B // bt, N // lane)

    x_spec = pl.BlockSpec((bt, lane), lambda i, j: (i, j))
    p_spec = pl.BlockSpec((1, lane), lambda i, j: (0, j))

    out_flat = pl.pallas_call(
        pad_prompter_kernel,
        out_shape=jax.ShapeDtypeStruct((B, N), x.dtype),
        grid_spec=pltpu.PrefetchScalarGridSpec(
            num_scalar_prefetch=0,
            grid=grid,
            in_specs=[x_spec, p_spec],
            out_specs=x_spec,
        ),
        compiler_params=pltpu.CompilerParams(
            dimension_semantics=("parallel", "parallel")),
    )(x_flat, prompt_flat)

    return out_flat.reshape(B, C, H, W)


if __name__ == "__main__":
    # Small, deterministic config (args.image_size=16, args.prompt_size=3).
    # NOTE: at this tiny size an XLA-fused pad+add would already be optimal;
    # the Pallas path is exercised here for correctness and pays off at
    # realistic sizes (e.g. 224x224, large batch).
    image_size = 16
    prompt_size = 3
    base_size = image_size - 2 * prompt_size
    batch = 2

    key = jax.random.PRNGKey(0)
    k_up, k_down, k_left, k_right, k_x = jax.random.split(key, 5)

    # torch.randn -> standard normal, same shapes as the module's __init__.
    pad_up    = jax.random.normal(k_up,    (1, 3, prompt_size, image_size), jnp.float32)
    pad_down  = jax.random.normal(k_down,  (1, 3, prompt_size, image_size), jnp.float32)
    pad_left  = jax.random.normal(k_left,  (1, 3, base_size, prompt_size), jnp.float32)
    pad_right = jax.random.normal(k_right, (1, 3, base_size, prompt_size), jnp.float32)

    x = jax.random.normal(k_x, (batch, 3, image_size, image_size), jnp.float32)

    out = pad_prompter_forward(x, pad_up, pad_down, pad_left, pad_right,
                               prompt_size, image_size)
    out = jax.block_until_ready(out)

    # Reference (mirrors the PyTorch concatenation exactly).
    base = jnp.zeros((1, 3, base_size, base_size), jnp.float32)
    prompt = jnp.concatenate([pad_left, base, pad_right], axis=3)
    prompt = jnp.concatenate([pad_up, prompt, pad_down], axis=2)
    ref = x + prompt  # broadcast over batch == torch.cat(B * [prompt])

    assert out.shape == (batch, 3, image_size, image_size)
    assert jnp.allclose(out, ref, atol=1e-6), "mismatch vs reference"
    print("KERNEL_OK")
</pallas_src>

<mosaic_0001>
module attributes {stable_mosaic.version = 11 : i64} {
  func.func @pad_prompter_kernel(%arg0: i32, %arg1: i32, %arg2: memref<2x768xf32, #tpu.memory_space<vmem>>, %arg3: memref<1x768xf32, #tpu.memory_space<vmem>>, %arg4: memref<2x768xf32, #tpu.memory_space<vmem>>) attributes {dimension_semantics = [#tpu.dimension_semantics<parallel>, #tpu.dimension_semantics<parallel>], iteration_bounds = array<i64: 1, 1>, scalar_prefetch = 0 : i64, scratch_operands = 0 : i64, tpu.core_type = #tpu.core_type<tc>, window_params = [{transform_indices = @transform_0, window_bounds = array<i64: 2, 768>}, {transform_indices = @transform_1, window_bounds = array<i64: 1, 768>}, {transform_indices = @transform_2, window_bounds = array<i64: 2, 768>}]} {
    %c0 = arith.constant 0 : index
    %c0_0 = arith.constant 0 : index
    %0 = vector.load %arg2[%c0, %c0_0] : memref<2x768xf32, #tpu.memory_space<vmem>>, vector<2x768xf32>
    %c0_1 = arith.constant 0 : index
    %c0_2 = arith.constant 0 : index
    %1 = vector.load %arg3[%c0_1, %c0_2] : memref<1x768xf32, #tpu.memory_space<vmem>>, vector<1x768xf32>
    %2 = vector.broadcast %1 : vector<1x768xf32> to vector<2x768xf32>
    %3 = arith.addf %0, %2 : vector<2x768xf32>
    %c0_3 = arith.constant 0 : index
    %c0_4 = arith.constant 0 : index
    %4 = vector.load %arg4[%c0_3, %c0_4] : memref<2x768xf32, #tpu.memory_space<vmem>>, vector<2x768xf32>
    tpu.vector_store %arg4[%c0_3, %c0_4], %3 {strides = array<i32>} : memref<2x768xf32, #tpu.memory_space<vmem>>, vector<2x768xf32>,
    return
  }
  func.func @transform_0(%arg0: i32, %arg1: i32) -> (i32, i32) {
    %c0_i32 = arith.constant 0 : i32
    return %arg0, %arg1 : i32, i32
  }
  func.func @transform_1(%arg0: i32, %arg1: i32) -> (i32, i32) {
    %c0_i32 = arith.constant 0 : i32
    %c0_i32_0 = arith.constant 0 : i32
    return %c0_i32, %arg1 : i32, i32
  }
  func.func @transform_2(%arg0: i32, %arg1: i32) -> (i32, i32) {
    %c0_i32 = arith.constant 0 : i32
    return %arg0, %arg1 : i32, i32
  }
}

</mosaic_0001>

<llo_original>
// kernel: tpu_custom_call.1
$region0: #{tpu_custom_call.1}
  #allocation0 [shape = 'u32[]', space=smem, size = 0x4, offset = 0x4, fixed_abs, tag = 'smem constant byte address 0x4 - core index']
  #allocation1 [shape = 'u32[144,128]{1,0:T(1,128)}', space=vmem, size = 0x12000, scoped, tag = 'internal scratch']
  %s0 = inlined_call_operand.hbm [shape: f32[2,768], index: 0, kind: input, shape index: {}]
  %s1 = inlined_call_operand.hbm [shape: f32[1,768], index: 1, kind: input, shape index: {}]
  %s2 = inlined_call_operand.hbm [shape: f32[2,768], index: 2, kind: output, shape index: {}]
  %s3 = sld [smem:[#allocation0]]
  $region26: #{tpu_custom_call.1} parent=0
    _
  %s5 = ssub.s32 1, %s3
  %s6 = scalar_select 0, %s5, %s3
  $region1: #{tpu_custom_call.1} parent=0
    #allocation2 [shape = 'u8[6144]{0}', space=vmem, size = 0x1800, scoped, tag = 'input window, operand 0, single buffered']
    #allocation3 [shape = 's32[1]{0}', space=sflag, size = 0x4, scoped, tag = 'scoped memory for tpu_custom_call.1']
    #allocation4 [shape = 's32[1]{0}', space=sflag, size = 0x4, scoped, tag = 'scoped memory for tpu_custom_call.1']
    #allocation5 [shape = 'u8[3072]{0}', space=vmem, size = 0xc00, scoped, tag = 'input window, operand 1, single buffered']
    #allocation6 [shape = 's32[1]{0}', space=sflag, size = 0x4, scoped, tag = 'scoped memory for tpu_custom_call.1']
    #allocation7 [shape = 'u8[6144]{0}', space=vmem, size = 0x1800, scoped, tag = 'output window, operand 0, single buffered']
    %7 = vsyncpa [#allocation3], 0
    %8 = vsyncpa [#allocation6], 0
    %9 = vsyncpa [#allocation4], 0
    // Predicated region
    $region2: #{tpu_custom_call.1} parent=1 // pred_check
      _
    $region3: #{tpu_custom_call.1} parent=1 // pred_check_branch
      %11 = sbr.rel (0) target = $region5
    $region4: #{tpu_custom_call.1} parent=1 // pred_region
      %s13 = ssub.s32 192, 192
      %14 = vsyncadd [#allocation3], %s13
      %s16 = sshll.u32 [#allocation2], 4
      %s17 = int_to_ptr.vmem [resolvable:$true] %s16
      %19 = dma.hbm_to_vmem [thread:$0]  %s0, 192, %s17, [#allocation3]
    $region5: #{tpu_custom_call.1} parent=1 // pred_fallthru
      _
    // Predicated region
    $region6: #{tpu_custom_call.1} parent=1 // pred_check
      _
    $region7: #{tpu_custom_call.1} parent=1 // pred_check_branch
      %21 = sbr.rel (0) target = $region9
    $region8: #{tpu_custom_call.1} parent=1 // pred_region
      %s23 = ssub.s32 96, 96
      %24 = vsyncadd [#allocation6], %s23
      %s26 = sshll.u32 [#allocation5], 4
      %s27 = int_to_ptr.vmem [resolvable:$true] %s26
      %29 = dma.hbm_to_vmem [thread:$0]  %s1, 96, %s27, [#allocation6]
    $region9: #{tpu_custom_call.1} parent=1 // pred_fallthru
      _
    // Predicated region
    $region10: #{tpu_custom_call.1} parent=1 // pred_check
      _
    $region11: #{tpu_custom_call.1} parent=1 // pred_check_branch
      %31 = sbr.rel (0) target = $region13
    $region12: #{tpu_custom_call.1} parent=1 // pred_region
      %32 = dma.done [#allocation3], 192
    $region13: #{tpu_custom_call.1} parent=1 // pred_fallthru
      _
    // Predicated region
    $region14: #{tpu_custom_call.1} parent=1 // pred_check
      _
    $region15: #{tpu_custom_call.1} parent=1 // pred_check_branch
      %34 = sbr.rel (0) target = $region17
    $region16: #{tpu_custom_call.1} parent=1 // pred_region
      %35 = dma.done [#allocation6], 96
    $region17: #{tpu_custom_call.1} parent=1 // pred_fallthru
      _
    %v36 = vld [vmem:[#allocation2] sm:$0xff]
    %v37 = vld [vmem:[#allocation2 + $0x8] sm:$0xf]
    %v38 = vld [vmem:[#allocation5] sm:$0x3f]
    %v40 = vlaneseq
    %v41 = vshrl.u32 %v40, 7
    %v42 = vsub.s32 0, %v41
    %v43 = vrot.slane %v38, %v42
    %v44 = vlaneseq
    %v45 = vshrl.u32 %v44, 7
    %v46 = vsub.s32 1, %v45
    %v47 = vrot.slane %v38, %v46
    %v48 = vlaneseq
    %v49 = vshrl.u32 %v48, 7
    %v50 = vsub.s32 2, %v49
    %v51 = vrot.slane %v38, %v50
    %v52 = vlaneseq
    %v53 = vshrl.u32 %v52, 7
    %v54 = vsub.s32 3, %v53
    %v55 = vrot.slane %v38, %v54
    %v56 = vlaneseq
    %v57 = vshrl.u32 %v56, 7
    %v58 = vsub.s32 4, %v57
    %v59 = vrot.slane %v38, %v58
    %v60 = vlaneseq
    %v61 = vshrl.u32 %v60, 7
    %v62 = vsub.s32 5, %v61
    %v63 = vrot.slane %v38, %v62
    %v64 = vcombine.low %v43, %v47
    %v65 = vcombine.low %v51, %v55
    %v67 = vunpack.c.l.s4 1983009808
    %v68 = vunpack.c.0.s8 %v67
    %v69 = vlaneseq
    %v70 = vshrl.u32 %v69, 7
    %v71 = vsub.s32 %v68, %v70
    %v72 = vrot.slane %v64, %v71
    %v74 = vunpack.c.l.s4 1983009808
    %v75 = vunpack.c.0.s8 %v74
    %v76 = vlaneseq
    %v77 = vshrl.u32 %v76, 7
    %v78 = vsub.s32 %v75, %v77
    %v79 = vrot.slane %v65, %v78
    %v80 = vcombine.low %v72, %v79
    %v81 = vcombine.low %v59, %v63
    %v83 = vunpack.c.l.s4 1983009808
    %v84 = vunpack.c.0.s8 %v83
    %v85 = vlaneseq
    %v86 = vshrl.u32 %v85, 7
    %v87 = vsub.s32 %v84, %v86
    %v88 = vrot.slane %v81, %v87
    %v91 = vadd.f32 %v36, %v80
    %v92 = vadd.f32 %v37, %v88
    %93 = vst [vmem:[#allocation7] sm:$0xff] %v91
    %94 = vst [vmem:[#allocation7 + $0x8] sm:$0xf] %v92
    // Predicated region
    $region18: #{tpu_custom_call.1} parent=1 // pred_check
      _
    $region19: #{tpu_custom_call.1} parent=1 // pred_check_branch
      %96 = sbr.rel (0) target = $region21
    $region20: #{tpu_custom_call.1} parent=1 // pred_region
      %s98 = ssub.s32 192, 192
      %99 = vsyncadd [#allocation4], %s98
      %s101 = sshll.u32 [#allocation7], 4
      %s102 = int_to_ptr.vmem [resolvable:$true] %s101
      %104 = dma.vmem_to_hbm [thread:$0]  %s102, 192, %s2, [#allocation4]
    $region21: #{tpu_custom_call.1} parent=1 // pred_fallthru
      _
    // Predicated region
    $region22: #{tpu_custom_call.1} parent=1 // pred_check
      _
    $region23: #{tpu_custom_call.1} parent=1 // pred_check_branch
      %106 = sbr.rel (0) target = $region25
    $region24: #{tpu_custom_call.1} parent=1 // pred_region
      %107 = dma.done [#allocation4], 192
    $region25: #{tpu_custom_call.1} parent=1 // pred_fallthru
      _
    %108 = vsyncpa [#allocation3], 1
    %109 = vsyncpa [#allocation6], 1
    %110 = vsyncpa [#allocation4], 1

</llo_original>
